<compile_context>
chip_gen: v7x
topology: tpu7x:2x2x1
jax: 0.10.0
libtpu: 0.0.40
codegen_flags: <defaults>
</compile_context>

<pallas_src>
import functools

import jax
import jax.numpy as jnp
import numpy as np
from jax import lax
from jax.experimental import pallas as pl
from jax.experimental.pallas import tpu as pltpu


# ----------------------------------------------------------------------------
# Kernels
# ----------------------------------------------------------------------------

def _equal_linear_kernel_single_k(x_ref, w_ref, b_ref, o_ref, *, lr_mul):
    """Fast path: whole K reduction in one grid step -> no scratch accumulator."""
    acc = lax.dot_general(
        x_ref[...], w_ref[...],
        dimension_numbers=(((1,), (1,)), ((), ())),   # x (tm,K) contracted with w (tn,K)
        preferred_element_type=jnp.float32)
    if lr_mul != 1.0:                                  # static Python branch
        acc = acc * lr_mul
    o_ref[...] = (acc + b_ref[...]).astype(o_ref.dtype)


def _equal_linear_kernel_multi_k(x_ref, w_ref, b_ref, o_ref, acc_ref, *, lr_mul):
    """General path: K tiled (innermost, 'arbitrary'); persistent f32 accumulator."""
    k = pl.program_id(2)

    @pl.when(k == 0)
    def _():
        acc_ref[...] = jnp.zeros_like(acc_ref)

    acc_ref[...] += lax.dot_general(
        x_ref[...], w_ref[...],
        dimension_numbers=(((1,), (1,)), ((), ())),
        preferred_element_type=jnp.float32)

    @pl.when(k == pl.num_programs(2) - 1)
    def _():
        acc = acc_ref[...]
        if lr_mul != 1.0:                              # static Python branch
            acc = acc * lr_mul
        o_ref[...] = (acc + b_ref[...]).astype(o_ref.dtype)


# ----------------------------------------------------------------------------
# Wrapper
# ----------------------------------------------------------------------------

def _round_up(a, m):
    return (a + m - 1) // m * m


def equal_linear(x, weight, bias, lr_mul=1.0,
                 *, tm_cap=512, tn_cap=512, tk_cap=1024):
    """EqualLinear forward.

    x:      (..., in_dim)        caller dtype (f32 / bf16 / ...)
    weight: (out_dim, in_dim)    PyTorch layout, consumed without transpose
    bias:   (out_dim,)
    """
    lead = x.shape[:-1]
    K = x.shape[-1]
    N = weight.shape[0]
    assert weight.shape[1] == K, "weight must be (out_dim, in_dim)"
    M = int(np.prod(lead)) if lead else 1

    out_dtype = x.dtype
    x2 = x.reshape(M, K)
    w2 = weight                                               # (N, K)
    # Bias is only N floats: fold lr_mul here, keep f32 for the epilogue add.
    b2 = (bias.astype(jnp.float32) * float(lr_mul)).reshape(1, N)

    # ---- tile heuristics -----------------------------------------------------
    # Sub-32-bit dtypes pack along sublanes -> 16 (bf16/f16) / 32 (8-bit) rows.
    sub = {4: 8, 2: 16, 1: 32}.get(jnp.dtype(x2.dtype).itemsize, 8)

    # M tile: round DOWN to sublane multiple (full-dim block when M < sublane).
    tm = M if M <= sub else min(sub * (M // sub), tm_cap)
    # N tile: lane axis -> multiple of 128, or full dim when N <= 128.
    tn = N if N <= 128 else min(128 * (N // 128), tn_cap)

    # K tile: single step whenever K fits (common EqualLinear case, K <= 1024);
    # otherwise prefer a 128-multiple divisor of K; only pad K as a last resort.
    if K <= tk_cap:
        tk, Kp = K, K
    else:
        tk = 0
        for cand in range(tk_cap, 0, -128):
            if K % cand == 0:
                tk = cand
                break
        if tk:
            Kp = K
        else:
            tk = tk_cap
            Kp = _round_up(K, tk)

    if Kp != K:  # reduction axis must be padded with real zeros for correctness
        x2 = jnp.pad(x2, ((0, 0), (0, Kp - K)))
        w2 = jnp.pad(w2, ((0, 0), (0, Kp - K)))

    gm = -(-M // tm)
    gn = -(-N // tn)
    # Megacore / v7x (2 TCs): ensure at least one 'parallel' axis has >= 2 blocks.
    if gm == 1 and gn == 1:
        if N >= 256:
            tn = _round_up(N // 2, 128)
            gn = -(-N // tn)
        elif M >= 2 * sub:
            tm = _round_up(M // 2, sub)
            gm = -(-M // tm)

    k_steps = Kp // tk

    cost = pl.CostEstimate(
        flops=2 * M * N * K,
        transcendentals=0,
        bytes_accessed=int(M * K * jnp.dtype(x.dtype).itemsize
                           + N * K * jnp.dtype(weight.dtype).itemsize
                           + N * 4
                           + M * N * jnp.dtype(out_dtype).itemsize))

    compiler_params = pltpu.CompilerParams(
        dimension_semantics=(("parallel", "parallel") if k_steps == 1
                             else ("parallel", "parallel", "arbitrary")),
        vmem_limit_bytes=32 * 1024 * 1024)

    # TODO(synk): on v7x, sweep pipeline_mode=pl.Buffered(3) for the K-streamed
    # x / w specs in the multi-K path.
    if k_steps == 1:
        out = pl.pallas_call(
            functools.partial(_equal_linear_kernel_single_k,
                              lr_mul=float(lr_mul)),
            out_shape=jax.ShapeDtypeStruct((M, N), out_dtype),
            grid=(gm, gn),
            in_specs=[
                pl.BlockSpec((tm, tk), lambda i, j: (i, 0)),   # x  (M, K)
                pl.BlockSpec((tn, tk), lambda i, j: (j, 0)),   # w  (N, K)
                pl.BlockSpec((1, tn), lambda i, j: (0, j)),    # bias (1, N)
            ],
            out_specs=pl.BlockSpec((tm, tn), lambda i, j: (i, j)),
            compiler_params=compiler_params,
            cost_estimate=cost,
        )(x2, w2, b2)
    else:
        out = pl.pallas_call(
            functools.partial(_equal_linear_kernel_multi_k,
                              lr_mul=float(lr_mul)),
            out_shape=jax.ShapeDtypeStruct((M, N), out_dtype),
            grid=(gm, gn, k_steps),
            in_specs=[
                pl.BlockSpec((tm, tk), lambda i, j, k: (i, k)),
                pl.BlockSpec((tn, tk), lambda i, j, k: (j, k)),
                pl.BlockSpec((1, tn), lambda i, j, k: (0, j)),
            ],
            out_specs=pl.BlockSpec((tm, tn), lambda i, j, k: (i, j)),
            scratch_shapes=[pltpu.VMEM((tm, tn), jnp.float32)],
            compiler_params=compiler_params,
            cost_estimate=cost,
        )(x2, w2, b2)

    return out.reshape(lead + (N,))


def equal_linear_reference(x, weight, bias, lr_mul=1.0):
    """Pure-JAX reference mirroring the PyTorch forward exactly."""
    w = weight.astype(jnp.float32) * lr_mul
    b = bias.astype(jnp.float32) * lr_mul
    return jnp.einsum('...k,nk->...n', x.astype(jnp.float32), w) + b


if __name__ == "__main__":
    key = jax.random.PRNGKey(0)

    # --- Test 1: f32, small style-network-like shapes (single-K fast path) ---
    B, S, IN_DIM, OUT_DIM = 2, 8, 32, 64
    LR_MUL = 0.5
    k1, k2, k3, key = jax.random.split(key, 4)
    x = jax.random.normal(k1, (B, S, IN_DIM), jnp.float32)
    weight = jax.random.normal(k2, (OUT_DIM, IN_DIM), jnp.float32)
    bias = jax.random.normal(k3, (OUT_DIM,), jnp.float32) * 0.1

    out = jax.block_until_ready(equal_linear(x, weight, bias, lr_mul=LR_MUL))
    ref = equal_linear_reference(x, weight, bias, lr_mul=LR_MUL)
    np.testing.assert_allclose(np.asarray(out), np.asarray(ref),
                               rtol=1e-3, atol=1e-3)
    assert out.shape == (B, S, OUT_DIM) and out.dtype == x.dtype

    # --- Test 2: bf16 (native MXU dtype), output stays bf16 ------------------
    xb, wb, bb = (x.astype(jnp.bfloat16), weight.astype(jnp.bfloat16),
                  bias.astype(jnp.bfloat16))
    outb = jax.block_until_ready(equal_linear(xb, wb, bb, lr_mul=LR_MUL))
    refb = equal_linear_reference(xb, wb, bb, lr_mul=LR_MUL)
    np.testing.assert_allclose(np.asarray(outb, dtype=np.float32),
                               np.asarray(refb), rtol=5e-2, atol=5e-2)
    assert outb.dtype == jnp.bfloat16

    # --- Test 3: multi-K accumulator path + partial (masked) M/N tiles -------
    M2, K2, N2 = 20, 256, 192
    k1, k2, k3, key = jax.random.split(key, 4)
    x3 = jax.random.normal(k1, (M2, K2), jnp.float32)
    w3 = jax.random.normal(k2, (N2, K2), jnp.float32)
    b3 = jax.random.normal(k3, (N2,), jnp.float32) * 0.1
    out3 = jax.block_until_ready(
        equal_linear(x3, w3, b3, lr_mul=1.0, tk_cap=128))
    ref3 = equal_linear_reference(x3, w3, b3, lr_mul=1.0)
    np.testing.assert_allclose(np.asarray(out3), np.asarray(ref3),
                               rtol=1e-3, atol=1e-3)

    print("KERNEL_OK")
</pallas_src>

<mosaic_0001>
module attributes {stable_mosaic.version = 11 : i64} {
  func.func @_equal_linear_kernel_single_k(%arg0: i32, %arg1: i32, %arg2: memref<8x32xf32, #tpu.memory_space<vmem>>, %arg3: memref<64x32xf32, #tpu.memory_space<vmem>>, %arg4: memref<1x64xf32, #tpu.memory_space<vmem>>, %arg5: memref<8x64xf32, #tpu.memory_space<vmem>>) attributes {dimension_semantics = [#tpu.dimension_semantics<parallel>, #tpu.dimension_semantics<parallel>], iteration_bounds = array<i64: 2, 1>, scalar_prefetch = 0 : i64, scratch_operands = 0 : i64, tpu.core_type = #tpu.core_type<tc>, window_params = [{transform_indices = @transform_0, window_bounds = array<i64: 8, 32>}, {transform_indices = @transform_1, window_bounds = array<i64: 64, 32>}, {transform_indices = @transform_2, window_bounds = array<i64: 1, 64>}, {transform_indices = @transform_3, window_bounds = array<i64: 8, 64>}]} {
    %c0 = arith.constant 0 : index
    %c0_0 = arith.constant 0 : index
    %0 = vector.load %arg2[%c0, %c0_0] : memref<8x32xf32, #tpu.memory_space<vmem>>, vector<8x32xf32>
    %c0_1 = arith.constant 0 : index
    %c0_2 = arith.constant 0 : index
    %1 = vector.load %arg3[%c0_1, %c0_2] : memref<64x32xf32, #tpu.memory_space<vmem>>, vector<64x32xf32>
    %cst = arith.constant dense<0.000000e+00> : vector<8x64xf32>
    %2 = tpu.matmul %0, %1, %cst {dimension_numbers = #tpu.dot_dimension_numbers<[1], [1], [0], [0], [0, 0, 1, 0], [], []>} : vector<8x32xf32>, vector<64x32xf32>, vector<8x64xf32> -> vector<8x64xf32>
    %cst_3 = arith.constant 5.000000e-01 : f32
    %3 = vector.broadcast %cst_3 : f32 to vector<8x64xf32>
    %4 = arith.mulf %2, %3 : vector<8x64xf32>
    %c0_4 = arith.constant 0 : index
    %c0_5 = arith.constant 0 : index
    %5 = vector.load %arg4[%c0_4, %c0_5] : memref<1x64xf32, #tpu.memory_space<vmem>>, vector<1x64xf32>
    %6 = vector.broadcast %5 : vector<1x64xf32> to vector<8x64xf32>
    %7 = arith.addf %4, %6 : vector<8x64xf32>
    %c0_6 = arith.constant 0 : index
    %c0_7 = arith.constant 0 : index
    %8 = vector.load %arg5[%c0_6, %c0_7] : memref<8x64xf32, #tpu.memory_space<vmem>>, vector<8x64xf32>
    tpu.vector_store %arg5[%c0_6, %c0_7], %7 {strides = array<i32>} : memref<8x64xf32, #tpu.memory_space<vmem>>, vector<8x64xf32>,
    return
  }
  func.func @transform_0(%arg0: i32, %arg1: i32) -> (i32, i32) {
    %c0_i32 = arith.constant 0 : i32
    %c0_i32_0 = arith.constant 0 : i32
    return %arg0, %c0_i32 : i32, i32
  }
  func.func @transform_1(%arg0: i32, %arg1: i32) -> (i32, i32) {
    %c0_i32 = arith.constant 0 : i32
    %c0_i32_0 = arith.constant 0 : i32
    return %arg1, %c0_i32 : i32, i32
  }
  func.func @transform_2(%arg0: i32, %arg1: i32) -> (i32, i32) {
    %c0_i32 = arith.constant 0 : i32
    %c0_i32_0 = arith.constant 0 : i32
    return %c0_i32, %arg1 : i32, i32
  }
  func.func @transform_3(%arg0: i32, %arg1: i32) -> (i32, i32) {
    %c0_i32 = arith.constant 0 : i32
    return %arg0, %arg1 : i32, i32
  }
}

</mosaic_0001>

<llo_original>
// kernel: tpu_custom_call.1
$region0: #{tpu_custom_call.1}
  #allocation0 [shape = 'u32[]', space=smem, size = 0x4, offset = 0x4, fixed_abs, tag = 'smem constant byte address 0x4 - core index']
  #allocation1 [shape = 'u32[144,128]{1,0:T(1,128)}', space=vmem, size = 0x12000, scoped, tag = 'internal scratch']
  %s0 = inlined_call_operand.vmem [shape: f32[16,32], index: 0, kind: input, shape index: {}]
  %s1 = inlined_call_operand.vmem [shape: f32[64,32], index: 1, kind: input, shape index: {}]
  %s2 = inlined_call_operand.vmem [shape: f32[1,64], index: 2, kind: input, shape index: {}]
  %s3 = inlined_call_operand.hbm [shape: f32[16,64], index: 3, kind: output, shape index: {}]
  %s4 = sld [smem:[#allocation0]]
  $region45: #{tpu_custom_call.1} parent=0
    _
  %s6 = ssub.s32 1, %s4
  %s7 = scalar_select 0, %s6, %s4
  $region1: #{tpu_custom_call.1} parent=0
    #allocation2 [shape = 'u8[8192]{0}', space=vmem, size = 0x2000, scoped, tag = 'output window, operand 0']
    #allocation3 [shape = 's32[2]{0}', space=sflag, size = 0x8, scoped, tag = 'scoped memory for tpu_custom_call.1']
    %8 = vsyncpa [#allocation3], 0
    %s9 = scalar_lea.sflag [#allocation3], 1
    %10 = vsyncpa %s9, 0
    loop: start=0, step=1, limit=4
    $region2: #{tpu_custom_call.1} parent=1 // loop_pre_header
      _
    $region3: #{tpu_custom_call.1} parent=1 // loop_header
      %s12 = sphi 0, %s16
      %p13 = scmp.ge.s32.totalorder %s12, 4
      %s19 = sphi 0, %s31
      %s20 = sphi 0, %s27
      %s21 = sphi 0, %s19
      %s22 = sphi 0, %s20
      %s23 = sphi 0, %s21
      %s24 = sphi 0, %s22
      %s34 = sphi 0, %s36
      %s37 = sphi 0, %s34
      %s38 = sphi 0, %s37
      %s54 = sphi 0, %s38
      %s60 = sphi 0, %s62
      %s63 = sphi 0, %s60
      %s64 = sphi 0, %s63
      %s80 = sphi 0, %s64
      %s86 = sphi 0, %s88
      %s89 = sphi 0, %s86
      %s90 = sphi 0, %s89
      %s106 = sphi 0, %s90
      %s114 = sphi 0, %s116
      %s117 = sphi 0, %s114
      %s118 = sphi 0, %s117
      %s134 = sphi 0, %s118
    $region4: #{tpu_custom_call.1} parent=1 // loop_header_branch
      %15 = sbr.rel (%p13) target = $region8
    $region5: #{tpu_custom_call.1} parent=1 // loop_body
      %s17 = ssub.s32 %s12, 1
      %s18 = ssub.s32 %s12, 2
      %s25 = sadd.s32 1, %s20
      %p26 = scmp.ge.s32.totalorder %s25, 1
      %s27 = scalar_select %p26, 0, %s25
      %s28 = sadd.s32 1, %s19
      %s29 = scalar_select %p26, %s28, %s19
      %p30 = scmp.ge.s32.totalorder %s29, 2
      %s31 = scalar_select %p30, 0, %s29
      %s32 = ssub.s32 %s19, %s31
      %p33 = scmp.eq.s32.totalorder %s32, 0
      %s35 = sadd.s32 %s34, 1
      %s36 = scalar_select %p33, %s34, %s35
      %p39 = pneg %p33
      %p40 = scmp.eq.s32.totalorder %s12, 1
      %p41 = por %p39, %p40
      %p42 = scmp.ne.s32.totalorder %s34, %s37
      %p43 = scmp.eq.s32.totalorder %s12, 0
      %p44 = por %p42, %p43
      %p45 = scmp.ne.s32.totalorder %s34, %s37
      %p46 = scmp.eq.s32.totalorder %s17, 1
      %p47 = por %p45, %p46
      %p48 = scmp.ne.s32.totalorder %s37, %s38
      %p49 = scmp.eq.s32.totalorder %s17, 0
      %p50 = por %p48, %p49
      %p51 = scmp.ne.s32.totalorder %s37, %s38
      %p52 = scmp.eq.s32.totalorder %s18, 1
      %p53 = por %p51, %p52
      %p55 = scmp.ne.s32.totalorder %s38, %s54
      %p56 = scmp.eq.s32.totalorder %s18, 0
      %p57 = por %p55, %p56
      %s58 = ssub.s32 %s20, %s27
      %p59 = scmp.eq.s32.totalorder %s58, 0
      %s61 = sadd.s32 %s60, 1
      %s62 = scalar_select %p59, %s60, %s61
      %p65 = pneg %p59
      %p66 = scmp.eq.s32.totalorder %s12, 1
      %p67 = por %p65, %p66
      %p68 = scmp.ne.s32.totalorder %s60, %s63
      %p69 = scmp.eq.s32.totalorder %s12, 0
      %p70 = por %p68, %p69
      %p71 = scmp.ne.s32.totalorder %s60, %s63
      %p72 = scmp.eq.s32.totalorder %s17, 1
      %p73 = por %p71, %p72
      %p74 = scmp.ne.s32.totalorder %s63, %s64
      %p75 = scmp.eq.s32.totalorder %s17, 0
      %p76 = por %p74, %p75
      %p77 = scmp.ne.s32.totalorder %s63, %s64
      %p78 = scmp.eq.s32.totalorder %s18, 1
      %p79 = por %p77, %p78
      %p81 = scmp.ne.s32.totalorder %s64, %s80
      %p82 = scmp.eq.s32.totalorder %s18, 0
      %p83 = por %p81, %p82
      %s84 = ssub.s32 %s20, %s27
      %p85 = scmp.eq.s32.totalorder %s84, 0
      %s87 = sadd.s32 %s86, 1
      %s88 = scalar_select %p85, %s86, %s87
      %p91 = pneg %p85
      %p92 = scmp.eq.s32.totalorder %s12, 1
      %p93 = por %p91, %p92
      %p94 = scmp.ne.s32.totalorder %s86, %s89
      %p95 = scmp.eq.s32.totalorder %s12, 0
      %p96 = por %p94, %p95
      %p97 = scmp.ne.s32.totalorder %s86, %s89
      %p98 = scmp.eq.s32.totalorder %s17, 1
      %p99 = por %p97, %p98
      %p100 = scmp.ne.s32.totalorder %s89, %s90
      %p101 = scmp.eq.s32.totalorder %s17, 0
      %p102 = por %p100, %p101
      %p103 = scmp.ne.s32.totalorder %s89, %s90
      %p104 = scmp.eq.s32.totalorder %s18, 1
      %p105 = por %p103, %p104
      %p107 = scmp.ne.s32.totalorder %s90, %s106
      %p108 = scmp.eq.s32.totalorder %s18, 0
      %p109 = por %p107, %p108
      %s110 = ssub.s32 %s19, %s31
      %s111 = ssub.s32 %s20, %s27
      %s112 = sor.u32 %s110, %s111
      %p113 = scmp.eq.s32.totalorder %s112, 0
      %s115 = sadd.s32 %s114, 1
      %s116 = scalar_select %p113, %s114, %s115
      %p119 = pneg %p113
      %p120 = scmp.eq.s32.totalorder %s12, 1
      %p121 = por %p119, %p120
      %p122 = scmp.ne.s32.totalorder %s114, %s117
      %p123 = scmp.eq.s32.totalorder %s12, 0
      %p124 = por %p122, %p123
      %p125 = scmp.ne.s32.totalorder %s114, %s117
      %p126 = scmp.eq.s32.totalorder %s17, 1
      %p127 = por %p125, %p126
      %p128 = scmp.ne.s32.totalorder %s117, %s118
      %p129 = scmp.eq.s32.totalorder %s17, 0
      %p130 = por %p128, %p129
      %p131 = scmp.ne.s32.totalorder %s117, %s118
      %p132 = scmp.eq.s32.totalorder %s18, 1
      %p133 = por %p131, %p132
      %p135 = scmp.ne.s32.totalorder %s118, %s134
      %p136 = scmp.eq.s32.totalorder %s18, 0
      %p137 = por %p135, %p136
      %p138 = scmp.le.s32.totalorder 1, %s12
      %p139 = scmp.lt.s32.totalorder %s12, 3
      %p140 = pnand %p138, %p139
      %p141 = pneg %p140
      // Predicated region
      $region9: #{tpu_custom_call.1} parent=5 // pred_check
        _
      $region10: #{tpu_custom_call.1} parent=5 // pred_check_branch
        %143 = sbr.rel (%p140) target = $region12
      $region11: #{tpu_custom_call.1} parent=5 // pred_region
        %s144 = ssub.s32 %s12, 1
        // Predicated region
        $region13: #{tpu_custom_call.1} parent=11 // pred_check
          %p145 = pneg %p76
        $region14: #{tpu_custom_call.1} parent=11 // pred_check_branch
          %147 = sbr.rel (%p145) target = $region16
        $region15: #{tpu_custom_call.1} parent=11 // pred_region
          %s148 = smul.u32 8, %s22
          %p149 = scmp.lt.s32.totalorder %s148, 7
          %s150 = scalar_select %p149, %s148, 7
          %s151 = smul.addr %s150, 8
          %s152 = scalar_lea.vmem %s1, %s151
          %s153 = smul.u32 8, %s22
        $region16: #{tpu_custom_call.1} parent=11 // pred_fallthru
          _
        // Predicated region
        $region17: #{tpu_custom_call.1} parent=11 // pred_check
          %p154 = pneg %p102
        $region18: #{tpu_custom_call.1} parent=11 // pred_check_branch
          %156 = sbr.rel (%p154) target = $region20
        $region19: #{tpu_custom_call.1} parent=11 // pred_region
          %p157 = scmp.lt.s32.totalorder %s22, 0
          %s158 = scalar_select %p157, %s22, 0
          %s159 = scalar_lea.vmem %s2, %s158
        $region20: #{tpu_custom_call.1} parent=11 // pred_fallthru
          _
      $region12: #{tpu_custom_call.1} parent=5 // pred_fallthru
        _
      %p160 = scmp.lt.s32.totalorder %s12, 2
      // Predicated region
      $region21: #{tpu_custom_call.1} parent=5 // pred_check
        %p161 = pneg %p160
      $region22: #{tpu_custom_call.1} parent=5 // pred_check_branch
        %163 = sbr.rel (%p161) target = $region24
      $region23: #{tpu_custom_call.1} parent=5 // pred_region
        // Predicated region
        $region25: #{tpu_custom_call.1} parent=23 // pred_check
          %p164 = pneg %p44
        $region26: #{tpu_custom_call.1} parent=23 // pred_check_branch
          %166 = sbr.rel (%p164) target = $region28
        $region27: #{tpu_custom_call.1} parent=23 // pred_region
          %p167 = scmp.lt.s32.totalorder %s19, 1
          %s168 = scalar_select %p167, %s19, 1
          %s169 = smul.addr %s168, 8
          %s170 = scalar_lea.vmem %s0, %s169
        $region28: #{tpu_custom_call.1} parent=23 // pred_fallthru
          _
      $region24: #{tpu_custom_call.1} parent=5 // pred_fallthru
        _
      %p171 = scmp.le.s32.totalorder 1, %s12
      %p172 = scmp.lt.s32.totalorder %s12, 3
      %p173 = pnand %p171, %p172
      %p174 = pneg %p173
      // Predicated region
      $region29: #{tpu_custom_call.1} parent=5 // pred_check
        _
      $region30: #{tpu_custom_call.1} parent=5 // pred_check_branch
        %176 = sbr.rel (%p173) target = $region32
      $region31: #{tpu_custom_call.1} parent=5 // pred_region
        %s177 = ssub.s32 %s12, 1
        %p178 = scmp.lt.s32.totalorder %s21, 1
        %s179 = scalar_select %p178, %s21, 1
        %s180 = smul.addr %s179, 8
        %s181 = scalar_lea.vmem %s0, %s180
        %p182 = pneg %p50
        %p183 = pneg %p47
        %s184 = smul.u32 8, %s22
        %p185 = scmp.lt.s32.totalorder %s184, 7
        %s186 = scalar_select %p185, %s184, 7
        %s187 = smul.addr %s186, 8
        %s188 = scalar_lea.vmem %s1, %s187
        %p189 = pneg %p76
        %p190 = pneg %p73
        %p191 = scmp.lt.s32.totalorder %s22, 0
        %s192 = scalar_select %p191, %s22, 0
        %s193 = scalar_lea.vmem %s2, %s192
        %p194 = pneg %p102
        %p195 = pneg %p99
        %p196 = pneg %p130
        %p197 = pneg %p127
        %s198 = sand.u32 %s117, 1
        %s199 = scalar_lea.sflag [#allocation3], %s198
        %s200 = sand.u32 %s117, 1
        %s201 = smul.addr %s200, 8
        %s202 = scalar_lea.vmem [#allocation2], %s201
        %p203 = scmp.lt.s32.totalorder %s21, 1
        %s204 = scalar_select %p203, %s21, 1
        %s205 = smul.addr %s204, 8
        %s206 = scalar_lea.vmem %s0, %s205
        %s207 = smul.u32 8, %s22
        %p208 = scmp.lt.s32.totalorder %s207, 7
        %s209 = scalar_select %p208, %s207, 7
        %s210 = smul.addr %s209, 8
        %s211 = scalar_lea.vmem %s1, %s210
        %s212 = smul.u32 8, %s22
        %p213 = scmp.lt.s32.totalorder %s22, 0
        %s214 = scalar_select %p213, %s22, 0
        %s215 = scalar_lea.vmem %s2, %s214
        %v216 = vld [vmem:[%s206] sm:$0xff]
        %v217 = vld [vmem:[%s211] sm:$0xff]
        %v218 = vld [vmem:[%s211 + $0x8] sm:$0xff]
        %v219 = vld [vmem:[%s211 + $0x10] sm:$0xff]
        %v220 = vld [vmem:[%s211 + $0x18] sm:$0xff]
        %v221 = vld [vmem:[%s211 + $0x20] sm:$0xff]
        %v222 = vld [vmem:[%s211 + $0x28] sm:$0xff]
        %v223 = vld [vmem:[%s211 + $0x30] sm:$0xff]
        %v224 = vld [vmem:[%s211 + $0x38] sm:$0xff]
        %vm225 = vcmask 261120
        %v227 = vsel %vm225, %v216, 0
        %v230 = vsel %vm225, %v217, 0
        %v233 = vsel %vm225, %v218, 0
        %v236 = vsel %vm225, %v219, 0
        %v239 = vsel %vm225, %v220, 0
        %v242 = vsel %vm225, %v221, 0
        %v245 = vsel %vm225, %v222, 0
        %v248 = vsel %vm225, %v223, 0
        %v251 = vsel %vm225, %v224, 0
        %253 = vmatprep.subr.mxu0 0.0
        %254 = vmatpush1.xpose.msra.mxu0 %v230
        %255 = vmatprep.subr.mxu0 0.0
        %256 = vmatpush1.xpose.msra.mxu0 %v233
        %257 = vmatprep.subr.mxu0 0.0
        %258 = vmatpush1.xpose.msra.mxu0 %v236
        %259 = vmatprep.subr.mxu0 0.0
        %260 = vmatpush1.xpose.msra.mxu0 %v239
        %261 = vmatprep.subr.mxu0 0.0
        %262 = vmatpush1.xpose.msra.mxu0 %v242
        %263 = vmatprep.subr.mxu0 0.0
        %264 = vmatpush1.xpose.msra.mxu0 %v245
        %265 = vmatprep.subr.mxu0 0.0
        %266 = vmatpush1.xpose.msra.mxu0 %v248
        %267 = vmatprep.subr.mxu0 0.0
        %268 = vmatpush1.xpose.msra.mxu0 %v251
        %269 = vmatprep.subr.mxu0 0.0
        %270 = vmatpush1.xpose.msra.mxu0 0.0
        %271 = vmatprep.subr.mxu0 0.0
        %272 = vmatpush1.xpose.msra.mxu0 0.0
        %273 = vmatprep.subr.mxu0 0.0
        %274 = vmatpush1.xpose.msra.mxu0 0.0
        %275 = vmatprep.subr.mxu0 0.0
        %276 = vmatpush1.xpose.msra.mxu0 0.0
        %277 = vmatprep.subr.mxu0 0.0
        %278 = vmatpush1.xpose.msra.mxu0 0.0
        %279 = vmatprep.subr.mxu0 0.0
        %280 = vmatpush1.xpose.msra.mxu0 0.0
        %281 = vmatprep.subr.mxu0 0.0
        %282 = vmatpush1.xpose.msra.mxu0 0.0
        %283 = vmatprep.subr.mxu0 0.0
        %284 = vmatpush1.xpose.msra.mxu0 0.0
        %285 = vmatprep.subr.mxu0 0.0
        %286 = vmatpush1.xpose.msra.mxu0 0.0
        %287 = vmatprep.subr.mxu0 0.0
        %288 = vmatpush1.xpose.msra.mxu0 0.0
        %289 = vmatprep.subr.mxu0 0.0
        %290 = vmatpush1.xpose.msra.mxu0 0.0
        %291 = vmatprep.subr.mxu0 0.0
        %292 = vmatpush1.xpose.msra.mxu0 0.0
        %293 = vmatprep.subr.mxu0 0.0
        %294 = vmatpush1.xpose.msra.mxu0 0.0
        %295 = vmatprep.subr.mxu0 0.0
        %296 = vmatpush1.xpose.msra.mxu0 0.0
        %297 = vmatprep.subr.mxu0 0.0
        %298 = vmatpush1.xpose.msra.mxu0 0.0
        %299 = vmatprep.subr.mxu0 0.0
        %300 = vmatpush1.xpose.msra.mxu0 0.0
        %301 = vmatprep.subr.mxu0 0.0
        %302 = vmatpush1.xpose.msra.mxu0 0.0
        %303 = vmatprep.subr.mxu0 0.0
        %304 = vmatpush1.xpose.msra.mxu0 0.0
        %305 = vmatprep.subr.mxu0 0.0
        %306 = vmatpush1.xpose.msra.mxu0 0.0
        %307 = vmatprep.subr.mxu0 0.0
        %308 = vmatpush1.xpose.msra.mxu0 0.0
        %309 = vmatprep.subr.mxu0 0.0
        %310 = vmatpush1.xpose.msra.mxu0 0.0
        %311 = vmatprep.subr.mxu0 0.0
        %312 = vmatpush1.xpose.msra.mxu0 0.0
        %313 = vmatprep.subr.mxu0 0.0
        %314 = vmatpush1.xpose.msra.mxu0 0.0
        %315 = vmatprep.subr.mxu0 0.0
        %316 = vmatpush1.xpose.msra.mxu0 0.0
        %317 = vmatprep.mubr.f32.mxu0 0.0
        %318 = vmatmul.mubr.f32.gmra.mrb[0].mxu0 %v227
        %v319 = vpop.f32.mrb[0].mxu0
        %v320 = vadd.f32 0.0, %v319
        %v321 = vpop.f32.mrb[0].mxu0
        %322 = vdwg.mxu0
        %v323 = vmul.f32 %v320, 0.5
        %v324 = vld [vmem:[%s215] sm:$0x1]
        %v326 = vlaneseq
        %v327 = vshrl.u32 %v326, 7
        %v328 = vsub.s32 0, %v327
        %v329 = vrot.slane %v324, %v328
        %v331 = vadd.f32 %v323, %v329
        %vm332 = vcmask 523264
        %333 = vst.msk [vmem:[%s202] sm:$0xff] %vm332, %v331
        %s334 = sand.u32 %s117, 1
        %s335 = scalar_lea.sflag [#allocation3], %s334
        %s336 = sand.u32 %s117, 1
        %s337 = smul.addr %s336, 8
        %s338 = scalar_lea.vmem [#allocation2], %s337
        // Predicated region
        $region33: #{tpu_custom_call.1} parent=31 // pred_check
          %p339 = pneg %p127
        $region34: #{tpu_custom_call.1} parent=31 // pred_check_branch
          %341 = sbr.rel (%p339) target = $region36
        $region35: #{tpu_custom_call.1} parent=31 // pred_region
          %s343 = ssub.s32 128, 128
          %344 = vsyncadd %s335, %s343
          %s345 = sadd.s32 %s22, %s21
          %s346 = smul.addr %s345, 128
          %s347 = scalar_lea.hbm %s3, %s346
          %s349 = sshll.u32 %s338, 4
          %s350 = int_to_ptr.vmem [resolvable:$true] %s349
          %352 = dma.vmem_to_hbm [thread:$0]  %s350, 128, %s347, %s335
        $region36: #{tpu_custom_call.1} parent=31 // pred_fallthru
          _
      $region32: #{tpu_custom_call.1} parent=5 // pred_fallthru
        _
      %p353 = scmp.le.s32.totalorder 2, %s12
      // Predicated region
      $region37: #{tpu_custom_call.1} parent=5 // pred_check
        %p354 = pneg %p353
      $region38: #{tpu_custom_call.1} parent=5 // pred_check_branch
        %356 = sbr.rel (%p354) target = $region40
      $region39: #{tpu_custom_call.1} parent=5 // pred_region
        %s357 = ssub.s32 %s12, 2
        // Predicated region
        $region41: #{tpu_custom_call.1} parent=39 // pred_check
          %p358 = pneg %p133
        $region42: #{tpu_custom_call.1} parent=39 // pred_check_branch
          %360 = sbr.rel (%p358) target = $region44
        $region43: #{tpu_custom_call.1} parent=39 // pred_region
          %s361 = sand.u32 %s118, 1
          %s362 = scalar_lea.sflag [#allocation3], %s361
          %s363 = sand.u32 %s118, 1
          %s364 = smul.addr %s363, 8
          %s365 = scalar_lea.vmem [#allocation2], %s364
          %366 = dma.done %s362, 128
        $region44: #{tpu_custom_call.1} parent=39 // pred_fallthru
          _
      $region40: #{tpu_custom_call.1} parent=5 // pred_fallthru
        _
    $region6: #{tpu_custom_call.1} parent=1 // loop_footer
      %s16 = sadd.s32 1, %s12
    $region7: #{tpu_custom_call.1} parent=1 // loop_footer_branch
      %11 = sbr.rel target = $region3
    $region8: #{tpu_custom_call.1} parent=1 // loop_exit
      _
    %367 = vsyncpa [#allocation3], 1
    %s368 = scalar_lea.sflag [#allocation3], 1
    %369 = vsyncpa %s368, 1

</llo_original>
